<compile_context>
chip_gen: v6e
topology: v6e:2x2x1
jax: 0.10.0
libtpu: 0.0.40
codegen_flags: <defaults>
</compile_context>

<pallas_src>
import math

import jax
import jax.numpy as jnp
from jax.experimental import pallas as pl
from jax.experimental.pallas import tpu as pltpu

_MIB = 1024 * 1024


def _pe_add_kernel(x_ref, pe_ref, o_ref):
    # x_ref, o_ref: (tr, tb, D) blocks; pe_ref: (tr, 1, D).
    # Size-1 batch dim broadcasts along the sublane axis inside the fused add
    # (no block-sized pe replica is materialized in VMEM).
    o_ref[...] = (x_ref[...] + pe_ref[...]).astype(o_ref.dtype)


def make_positional_encoding(d_model: int, max_len: int = 512,
                             dtype=jnp.float32) -> jnp.ndarray:
    """Sinusoidal PE table, shape (max_len, d_model). Handles odd d_model."""
    position = jnp.arange(0, max_len, dtype=jnp.float32)[:, None]            # (L, 1)
    div_term = jnp.exp(
        jnp.arange(0, d_model, 2, dtype=jnp.float32)
        * (-math.log(10000.0) / d_model)
    )                                                                         # (ceil(D/2),)
    angles = position * div_term                                              # (L, ceil(D/2))
    pe = jnp.zeros((max_len, d_model), dtype=jnp.float32)
    pe = pe.at[:, 0::2].set(jnp.sin(angles))
    pe = pe.at[:, 1::2].set(jnp.cos(angles)[:, : d_model // 2])
    return pe.astype(dtype)


def _round_up(x: int, m: int) -> int:
    return -(-x // m) * m


def _plan_tiling(S: int, B: int, D: int, itemsize: int, target_block_bytes: int):
    """Pick (tr, tb, vmem_limit_bytes) for (tr, tb, D) blocks of a (S, B, D) array."""
    lane = 128
    sub = max(8, 32 // itemsize)          # sublane packing: f32->8, bf16->16, i8->32
    pD = _round_up(D, lane)
    row_bytes = _round_up(B, sub) * pD * itemsize   # one seq position, full batch (VMEM-padded)

    if 8 * row_bytes <= target_block_bytes or B <= sub:
        tb = B                                        # common case: keep full batch per block
    else:
        # Even a few rows blow the budget: tile the batch axis in sublane-multiple
        # chunks so the (8,128) rule holds and pe replication stays trivial.
        chunk = (target_block_bytes // (8 * pD * itemsize)) // sub * sub
        tb = int(min(max(sub, chunk), B))

    tb_bytes = _round_up(tb, sub) * pD * itemsize
    tr = int(min(max(1, target_block_bytes // tb_bytes), S))

    # v7x megacore: guarantee >=2 grid steps so "parallel" can shard across 2 TCs.
    if pl.cdiv(S, tr) * pl.cdiv(B, tb) == 1 and S >= 16:
        tr = -(-S // 2)

    # Explicit scoped-VMEM budget: double-buffered x/out/pe blocks + slack for
    # elementwise temps.  v5e default is only 16 MiB, so always pass a limit;
    # cap at 64 MiB (v7x physical VMEM per TC).
    x_blk = tr * _round_up(tb, sub) * pD * itemsize
    pe_blk = tr * sub * pD * itemsize                 # (tr, 1, D): the 1 pads to a sublane tile
    vmem_needed = 2 * (2 * x_blk + pe_blk) + x_blk
    vmem_limit = int(min(64 * _MIB, max(32 * _MIB, vmem_needed)))
    return tr, tb, vmem_limit


def positional_encoding_forward(x: jnp.ndarray, pe_table: jnp.ndarray,
                                *, target_block_bytes: int = 4 * _MIB,
                                donate_x: bool = False) -> jnp.ndarray:
    """y = x + pe[:S]  (dropout in eval mode == identity).

    x:        (S, B, D)   seq-major, like the torch module
    pe_table: (max_len, D)

    target_block_bytes: ~4 MiB is a good default on v5e/v6e; use 8-12 MiB on v7x.
    donate_x: alias x -> output (set True when x is donated inside a larger jit).
    """
    S, B, D = map(int, x.shape)
    dtype = x.dtype
    itemsize = jnp.dtype(dtype).itemsize

    # One-time slice + dtype unification; explicit size-1 batch axis so the
    # kernel broadcast is a cheap size-1 sublane broadcast. No (S,B,D) pre-expansion.
    pe = pe_table[:S, :].astype(dtype).reshape(S, 1, D)

    tr, tb, vmem_limit = _plan_tiling(S, B, D, itemsize, target_block_bytes)
    grid = (pl.cdiv(S, tr), pl.cdiv(B, tb))   # batch axis innermost -> pe block stays resident

    out = pl.pallas_call(
        _pe_add_kernel,
        out_shape=jax.ShapeDtypeStruct((S, B, D), dtype),
        grid_spec=pltpu.PrefetchScalarGridSpec(
            num_scalar_prefetch=0,
            grid=grid,
            in_specs=[
                pl.BlockSpec((tr, tb, D), lambda i, j: (i, j, 0)),
                pl.BlockSpec((tr, 1, D), lambda i, j: (i, 0, 0)),
            ],
            out_specs=pl.BlockSpec((tr, tb, D), lambda i, j: (i, j, 0)),
        ),
        compiler_params=pltpu.CompilerParams(
            dimension_semantics=("parallel", "parallel"),
            vmem_limit_bytes=vmem_limit,
        ),
        cost_estimate=pl.CostEstimate(
            flops=S * B * D,
            transcendentals=0,
            bytes_accessed=(2 * S * B * D + S * D) * itemsize,
        ),
        input_output_aliases=({0: 0} if donate_x else {}),
    )(x, pe)

    return out


if __name__ == "__main__":
    # 1) Small shapes consistent with the module: seq=8, batch=2, d_model=32.
    S, B, D = 8, 2, 32
    x = jax.random.normal(jax.random.PRNGKey(0), (S, B, D), dtype=jnp.float32)
    pe_table = make_positional_encoding(d_model=D, max_len=512)
    y_ref = x + pe_table[:S, None, :]
    y = jax.block_until_ready(positional_encoding_forward(x, pe_table))
    assert y.shape == (S, B, D)
    assert jnp.allclose(y, y_ref, atol=1e-6, rtol=1e-6)

    # 2) Multi-row-block tiled path (tiny target block -> several grid steps).
    S2, B2, D2 = 64, 4, 128
    x2 = jax.random.normal(jax.random.PRNGKey(0), (S2, B2, D2), dtype=jnp.float32)
    pe2 = make_positional_encoding(d_model=D2, max_len=512)
    y2_ref = x2 + pe2[:S2, None, :]
    y2 = jax.block_until_ready(
        positional_encoding_forward(x2, pe2, target_block_bytes=64 * 1024))
    assert jnp.allclose(y2, y2_ref, atol=1e-6, rtol=1e-6)

    # 3) Batch-axis tiling path (rows too wide for the block budget -> 2-D grid).
    S3, B3, D3 = 16, 16, 128
    x3 = jax.random.normal(jax.random.PRNGKey(0), (S3, B3, D3), dtype=jnp.float32)
    pe3 = make_positional_encoding(d_model=D3, max_len=512)
    y3_ref = x3 + pe3[:S3, None, :]
    y3 = jax.block_until_ready(
        positional_encoding_forward(x3, pe3, target_block_bytes=16 * 1024))
    assert jnp.allclose(y3, y3_ref, atol=1e-6, rtol=1e-6)

    # 4) bf16 path + the >=2-grid-step split (default block covers all of S).
    xb = x2.astype(jnp.bfloat16)
    yb_ref = xb + pe2[:S2, None, :].astype(jnp.bfloat16)
    yb = jax.block_until_ready(positional_encoding_forward(xb, pe2))
    assert jnp.allclose(yb.astype(jnp.float32), yb_ref.astype(jnp.float32),
                        atol=1e-2, rtol=1e-2)

    print("KERNEL_OK")
</pallas_src>

<mosaic_0001>
module attributes {stable_mosaic.version = 11 : i64} {
  func.func @_pe_add_kernel(%arg0: i32, %arg1: i32, %arg2: memref<8x2x32xf32, #tpu.memory_space<vmem>>, %arg3: memref<8x1x32xf32, #tpu.memory_space<vmem>>, %arg4: memref<8x2x32xf32, #tpu.memory_space<vmem>>) attributes {dimension_semantics = [#tpu.dimension_semantics<parallel>, #tpu.dimension_semantics<parallel>], iteration_bounds = array<i64: 1, 1>, scalar_prefetch = 0 : i64, scratch_operands = 0 : i64, tpu.core_type = #tpu.core_type<tc>, window_params = [{transform_indices = @transform_0, window_bounds = array<i64: 8, 2, 32>}, {transform_indices = @transform_1, window_bounds = array<i64: 8, 1, 32>}, {transform_indices = @transform_2, window_bounds = array<i64: 8, 2, 32>}]} {
    %c0 = arith.constant 0 : index
    %c0_0 = arith.constant 0 : index
    %c0_1 = arith.constant 0 : index
    %0 = vector.load %arg2[%c0, %c0_0, %c0_1] : memref<8x2x32xf32, #tpu.memory_space<vmem>>, vector<8x2x32xf32>
    %c0_2 = arith.constant 0 : index
    %c0_3 = arith.constant 0 : index
    %c0_4 = arith.constant 0 : index
    %1 = vector.load %arg3[%c0_2, %c0_3, %c0_4] : memref<8x1x32xf32, #tpu.memory_space<vmem>>, vector<8x1x32xf32>
    %2 = vector.broadcast %1 : vector<8x1x32xf32> to vector<8x2x32xf32>
    %3 = arith.addf %0, %2 : vector<8x2x32xf32>
    %c0_5 = arith.constant 0 : index
    %c0_6 = arith.constant 0 : index
    %c0_7 = arith.constant 0 : index
    %4 = vector.load %arg4[%c0_5, %c0_6, %c0_7] : memref<8x2x32xf32, #tpu.memory_space<vmem>>, vector<8x2x32xf32>
    tpu.vector_store %arg4[%c0_5, %c0_6, %c0_7], %3 {strides = array<i32>} : memref<8x2x32xf32, #tpu.memory_space<vmem>>, vector<8x2x32xf32>,
    return
  }
  func.func @transform_0(%arg0: i32, %arg1: i32) -> (i32, i32, i32) {
    %c0_i32 = arith.constant 0 : i32
    %c0_i32_0 = arith.constant 0 : i32
    return %arg0, %arg1, %c0_i32 : i32, i32, i32
  }
  func.func @transform_1(%arg0: i32, %arg1: i32) -> (i32, i32, i32) {
    %c0_i32 = arith.constant 0 : i32
    %c0_i32_0 = arith.constant 0 : i32
    %c0_i32_1 = arith.constant 0 : i32
    return %arg0, %c0_i32, %c0_i32_0 : i32, i32, i32
  }
  func.func @transform_2(%arg0: i32, %arg1: i32) -> (i32, i32, i32) {
    %c0_i32 = arith.constant 0 : i32
    %c0_i32_0 = arith.constant 0 : i32
    return %arg0, %arg1, %c0_i32 : i32, i32, i32
  }
}

</mosaic_0001>

<llo_original>
// kernel: tpu_custom_call.1
$region0: #{tpu_custom_call.1}
  #allocation0 [shape = 'u32[]', space=smem, size = 0x4, offset = 0x4, fixed_abs, tag = 'smem constant byte address 0x4 - core index']
  #allocation1 [shape = 'u32[144,128]{1,0:T(1,128)}', space=vmem, size = 0x12000, scoped, tag = 'internal scratch']
  %s0 = inlined_call_operand.hbm [shape: f32[8,2,32], index: 0, kind: input, shape index: {}]
  %s1 = inlined_call_operand.hbm [shape: f32[8,1,32], index: 1, kind: input, shape index: {}]
  %s2 = inlined_call_operand.hbm [shape: f32[8,2,32], index: 2, kind: output, shape index: {}]
  %s3 = sld [smem:[#allocation0]]
  $region26: #{tpu_custom_call.1} parent=0
    _
  %s5 = ssub.s32 1, %s3
  %s6 = scalar_select 0, %s5, %s3
  $region1: #{tpu_custom_call.1} parent=0
    #allocation2 [shape = 'u8[8192]{0}', space=vmem, size = 0x2000, scoped, tag = 'input window, operand 0, single buffered']
    #allocation3 [shape = 's32[1]{0}', space=sflag, size = 0x4, scoped, tag = 'scoped memory for tpu_custom_call.1']
    #allocation4 [shape = 's32[1]{0}', space=sflag, size = 0x4, scoped, tag = 'scoped memory for tpu_custom_call.1']
    #allocation5 [shape = 'u8[4096]{0}', space=vmem, size = 0x1000, scoped, tag = 'input window, operand 1, single buffered']
    #allocation6 [shape = 's32[1]{0}', space=sflag, size = 0x4, scoped, tag = 'scoped memory for tpu_custom_call.1']
    #allocation7 [shape = 'u8[8192]{0}', space=vmem, size = 0x2000, scoped, tag = 'output window, operand 0, single buffered']
    %7 = vsyncpa [#allocation3], 0
    %8 = vsyncpa [#allocation6], 0
    %9 = vsyncpa [#allocation4], 0
    // Predicated region
    $region2: #{tpu_custom_call.1} parent=1 // pred_check
      _
    $region3: #{tpu_custom_call.1} parent=1 // pred_check_branch
      %11 = sbr.rel (0) target = $region5
    $region4: #{tpu_custom_call.1} parent=1 // pred_region
      %s13 = ssub.s32 256, 256
      %14 = vsyncadd [#allocation3], %s13
      %s15 = sshll.u32 [#allocation2], 4
      %s16 = int_to_ptr.vmem [resolvable:$true] %s15
      %21 = dma.hbm_to_vmem [thread:$0]  %s0, 256, %s16, [#allocation3], 32, 32, 2
    $region5: #{tpu_custom_call.1} parent=1 // pred_fallthru
      _
    // Predicated region
    $region6: #{tpu_custom_call.1} parent=1 // pred_check
      _
    $region7: #{tpu_custom_call.1} parent=1 // pred_check_branch
      %23 = sbr.rel (0) target = $region9
    $region8: #{tpu_custom_call.1} parent=1 // pred_region
      %s25 = ssub.s32 128, 128
      %26 = vsyncadd [#allocation6], %s25
      %s27 = sshll.u32 [#allocation5], 4
      %s28 = int_to_ptr.vmem [resolvable:$true] %s27
      %33 = dma.hbm_to_vmem [thread:$0]  %s1, 128, %s28, [#allocation6], 16, 16, 1
    $region9: #{tpu_custom_call.1} parent=1 // pred_fallthru
      _
    // Predicated region
    $region10: #{tpu_custom_call.1} parent=1 // pred_check
      _
    $region11: #{tpu_custom_call.1} parent=1 // pred_check_branch
      %35 = sbr.rel (0) target = $region13
    $region12: #{tpu_custom_call.1} parent=1 // pred_region
      %36 = dma.done [#allocation3], 256
    $region13: #{tpu_custom_call.1} parent=1 // pred_fallthru
      _
    // Predicated region
    $region14: #{tpu_custom_call.1} parent=1 // pred_check
      _
    $region15: #{tpu_custom_call.1} parent=1 // pred_check_branch
      %38 = sbr.rel (0) target = $region17
    $region16: #{tpu_custom_call.1} parent=1 // pred_region
      %39 = dma.done [#allocation6], 128
    $region17: #{tpu_custom_call.1} parent=1 // pred_fallthru
      _
    %v40 = vld [vmem:[#allocation2] sm:$0x3]
    %v41 = vld [vmem:[#allocation2 + $0x2] sm:$0x3]
    %v42 = vld [vmem:[#allocation2 + $0x4] sm:$0x3]
    %v43 = vld [vmem:[#allocation2 + $0x6] sm:$0x3]
    %v44 = vld [vmem:[#allocation2 + $0x8] sm:$0x3]
    %v45 = vld [vmem:[#allocation2 + $0xa] sm:$0x3]
    %v46 = vld [vmem:[#allocation2 + $0xc] sm:$0x3]
    %v47 = vld [vmem:[#allocation2 + $0xe] sm:$0x3]
    %v48 = vld [vmem:[#allocation5] sm:$0x1]
    %v49 = vld [vmem:[#allocation5 + $0x1] sm:$0x1]
    %v50 = vld [vmem:[#allocation5 + $0x2] sm:$0x1]
    %v51 = vld [vmem:[#allocation5 + $0x3] sm:$0x1]
    %v52 = vld [vmem:[#allocation5 + $0x4] sm:$0x1]
    %v53 = vld [vmem:[#allocation5 + $0x5] sm:$0x1]
    %v54 = vld [vmem:[#allocation5 + $0x6] sm:$0x1]
    %v55 = vld [vmem:[#allocation5 + $0x7] sm:$0x1]
    %v64 = vlaneseq
    %v65 = vshrl.u32 %v64, 7
    %v66 = vsub.s32 0, %v65
    %v67 = vrot.slane %v48, %v66
    %v68 = vlaneseq
    %v69 = vshrl.u32 %v68, 7
    %v70 = vsub.s32 0, %v69
    %v71 = vrot.slane %v49, %v70
    %v72 = vlaneseq
    %v73 = vshrl.u32 %v72, 7
    %v74 = vsub.s32 0, %v73
    %v75 = vrot.slane %v50, %v74
    %v76 = vlaneseq
    %v77 = vshrl.u32 %v76, 7
    %v78 = vsub.s32 0, %v77
    %v79 = vrot.slane %v51, %v78
    %v80 = vlaneseq
    %v81 = vshrl.u32 %v80, 7
    %v82 = vsub.s32 0, %v81
    %v83 = vrot.slane %v52, %v82
    %v84 = vlaneseq
    %v85 = vshrl.u32 %v84, 7
    %v86 = vsub.s32 0, %v85
    %v87 = vrot.slane %v53, %v86
    %v88 = vlaneseq
    %v89 = vshrl.u32 %v88, 7
    %v90 = vsub.s32 0, %v89
    %v91 = vrot.slane %v54, %v90
    %v92 = vlaneseq
    %v93 = vshrl.u32 %v92, 7
    %v94 = vsub.s32 0, %v93
    %v95 = vrot.slane %v55, %v94
    %v104 = vadd.f32 %v40, %v67
    %v105 = vadd.f32 %v41, %v71
    %v106 = vadd.f32 %v42, %v75
    %v107 = vadd.f32 %v43, %v79
    %v108 = vadd.f32 %v44, %v83
    %v109 = vadd.f32 %v45, %v87
    %v110 = vadd.f32 %v46, %v91
    %v111 = vadd.f32 %v47, %v95
    %vm112 = vcmask 254976
    %113 = vst.msk [vmem:[#allocation7] sm:$0x3] %vm112, %v104
    %114 = vst.msk [vmem:[#allocation7 + $0x2] sm:$0x3] %vm112, %v105
    %115 = vst.msk [vmem:[#allocation7 + $0x4] sm:$0x3] %vm112, %v106
    %116 = vst.msk [vmem:[#allocation7 + $0x6] sm:$0x3] %vm112, %v107
    %117 = vst.msk [vmem:[#allocation7 + $0x8] sm:$0x3] %vm112, %v108
    %118 = vst.msk [vmem:[#allocation7 + $0xa] sm:$0x3] %vm112, %v109
    %119 = vst.msk [vmem:[#allocation7 + $0xc] sm:$0x3] %vm112, %v110
    %120 = vst.msk [vmem:[#allocation7 + $0xe] sm:$0x3] %vm112, %v111
    // Predicated region
    $region18: #{tpu_custom_call.1} parent=1 // pred_check
      _
    $region19: #{tpu_custom_call.1} parent=1 // pred_check_branch
      %122 = sbr.rel (0) target = $region21
    $region20: #{tpu_custom_call.1} parent=1 // pred_region
      %s124 = ssub.s32 256, 256
      %125 = vsyncadd [#allocation4], %s124
      %s126 = sshll.u32 [#allocation7], 4
      %s127 = int_to_ptr.vmem [resolvable:$true] %s126
      %132 = dma.vmem_to_hbm [thread:$0]  %s127, 256, %s2, [#allocation4], 32, 32, 2
    $region21: #{tpu_custom_call.1} parent=1 // pred_fallthru
      _
    // Predicated region
    $region22: #{tpu_custom_call.1} parent=1 // pred_check
      _
    $region23: #{tpu_custom_call.1} parent=1 // pred_check_branch
      %134 = sbr.rel (0) target = $region25
    $region24: #{tpu_custom_call.1} parent=1 // pred_region
      %135 = dma.done [#allocation4], 256
    $region25: #{tpu_custom_call.1} parent=1 // pred_fallthru
      _
    %136 = vsyncpa [#allocation3], 1
    %137 = vsyncpa [#allocation6], 1
    %138 = vsyncpa [#allocation4], 1

</llo_original>
